<compile_context>
chip_gen: v7x
topology: tpu7x:2x2x1
jax: 0.10.0
libtpu: 0.0.40
codegen_flags: <defaults>
</compile_context>

<pallas_src>
import functools

import jax
import jax.numpy as jnp
from jax.experimental import pallas as pl
from jax.experimental.pallas import tpu as pltpu


def _mlp_kernel(x_ref,
                w1_ref, b1_ref,
                w2_ref, b2_ref,
                w3_ref, b3_ref,
                w4_ref, b4_ref,
                w5_ref, b5_ref,
                o_ref):
    """Fused 5-layer MLP on one (input_size, TB) feature-major batch tile.

    5 MXU matmuls + 4 VPU ReLUs.  All activations are (feat, TB) with TB on
    lanes (lane-dense); bias-add / ReLU / accumulation stay in f32.
    """
    def layer(h, w_ref, b_ref, relu):
        # (out_feat, in_feat) @ (in_feat, TB) -> (out_feat, TB), f32 accumulate.
        acc = jnp.dot(w_ref[...], h.astype(w_ref.dtype),
                      preferred_element_type=jnp.float32)
        acc = acc + b_ref[...].astype(jnp.float32)      # (out_feat, 1) bcast
        if relu:
            acc = jnp.maximum(acc, 0.0)
        return acc

    h = x_ref[...].astype(jnp.float32)                   # (input_size, TB)
    h = layer(h, w1_ref, b1_ref, relu=True)
    h = layer(h, w2_ref, b2_ref, relu=True)
    h = layer(h, w3_ref, b3_ref, relu=True)
    h = layer(h, w4_ref, b4_ref, relu=True)
    h = layer(h, w5_ref, b5_ref, relu=False)
    o_ref[...] = h.astype(o_ref.dtype)                   # (out_size, TB) lane-dense


def _round_up(n, m):
    return ((n + m - 1) // m) * m


@functools.partial(jax.jit, static_argnames=("batch_tile",))
def regression_nn_forward(x, params, *, batch_tile=4096):
    """x: (B, input_size) f32.

    params: dict with
      w1..w5 : (out_features, in_features)   (PyTorch nn.Linear layout)
      b1..b5 : (out_features, 1)
    Returns (B, output_size) f32.
    """
    B, input_size = x.shape
    out_size = params["w5"].shape[0]

    # --- Batch tiling: batch lives on lanes, so tile in multiples of 128. ---
    b_pad = _round_up(B, 128)                      # minimal lane padding
    tile_cap = max(128, _round_up(min(batch_tile, b_pad), 128))
    n_steps = pl.cdiv(b_pad, tile_cap)
    tb = _round_up(pl.cdiv(b_pad, n_steps), 128)   # balance tiles, avoid ~2x waste
    b_padded = n_steps * tb

    # Feature-major (transposed) input, zero-padded along the batch/lane axis.
    xt = jnp.pad(x.T, ((0, 0), (0, b_padded - B)))  # (input_size, b_padded)

    grid = (n_steps,)

    # Constant-index blocks for weights & biases: DMA'd once, resident in VMEM.
    def const_spec(arr):
        return pl.BlockSpec(arr.shape, lambda i: (0, 0))

    in_specs = [
        pl.BlockSpec((input_size, tb), lambda i: (0, i)),   # streaming x tile
        const_spec(params["w1"]), const_spec(params["b1"]),
        const_spec(params["w2"]), const_spec(params["b2"]),
        const_spec(params["w3"]), const_spec(params["b3"]),
        const_spec(params["w4"]), const_spec(params["b4"]),
        const_spec(params["w5"]), const_spec(params["b5"]),
    ]
    out_specs = pl.BlockSpec((out_size, tb), lambda i: (0, i))

    out_t = pl.pallas_call(
        _mlp_kernel,
        out_shape=jax.ShapeDtypeStruct((out_size, b_padded), jnp.float32),
        grid=grid,
        in_specs=in_specs,
        out_specs=out_specs,
        compiler_params=pltpu.CompilerParams(
            dimension_semantics=("parallel",),   # shard batch tiles across TCs (v7x)
        ),
    )(xt,
      params["w1"], params["b1"],
      params["w2"], params["b2"],
      params["w3"], params["b3"],
      params["w4"], params["b4"],
      params["w5"], params["b5"])

    return out_t[:, :B].T                           # (B, out_size)


def init_params(key, input_size, hidden_size, output_size, dtype=jnp.float32):
    """nn.Linear-style init: uniform(-1/sqrt(fan_in), 1/sqrt(fan_in)).

    Weights are kept in PyTorch layout (out_features, in_features); biases as
    (out_features, 1) columns (they broadcast over the lane/batch axis inside
    the kernel).  Use dtype=jnp.bfloat16 on v6e/v7x for the native-bf16 MXU
    path (accumulation stays f32 in the kernel); keep f32 on v5e.
    """
    sizes = [(hidden_size, input_size),
             (hidden_size, hidden_size),
             (hidden_size, hidden_size),
             (hidden_size, hidden_size),
             (output_size, hidden_size)]
    params = {}
    for i, (fan_out, fan_in) in enumerate(sizes, start=1):
        key, kw, kb = jax.random.split(key, 3)
        bound = 1.0 / (fan_in ** 0.5)
        params[f"w{i}"] = jax.random.uniform(
            kw, (fan_out, fan_in), jnp.float32,
            minval=-bound, maxval=bound).astype(dtype)
        params[f"b{i}"] = jax.random.uniform(
            kb, (fan_out, 1), jnp.float32,
            minval=-bound, maxval=bound).astype(dtype)
    return params


def _reference_forward(x, p):
    """Pure-JAX f32 reference (batch-major, matches PyTorch semantics)."""
    h = x
    for i in range(1, 5):
        h = jnp.maximum(h @ p[f"w{i}"].astype(jnp.float32).T
                        + p[f"b{i}"].astype(jnp.float32).T, 0.0)
    return h @ p["w5"].astype(jnp.float32).T + p["b5"].astype(jnp.float32).T


if __name__ == "__main__":
    batch = 8
    input_size = 16
    hidden_size = 32
    output_size = 4

    key = jax.random.PRNGKey(0)
    key, kx = jax.random.split(key)
    x = jax.random.normal(kx, (batch, input_size), dtype=jnp.float32)
    params = init_params(key, input_size, hidden_size, output_size)

    out = jax.block_until_ready(regression_nn_forward(x, params))
    ref = _reference_forward(x, params)
    assert out.shape == (batch, output_size)
    assert jnp.allclose(out, ref, atol=1e-5, rtol=1e-5)

    # Multi-grid-step path: B=1000 pads only to 1024 (not to a tile multiple
    # of the default 4096) and runs 4 tiles of 256 rows.
    key, kx2 = jax.random.split(key)
    x_big = jax.random.normal(kx2, (1000, input_size), dtype=jnp.float32)
    out_big = jax.block_until_ready(
        regression_nn_forward(x_big, params, batch_tile=256))
    ref_big = _reference_forward(x_big, params)
    assert out_big.shape == (1000, output_size)
    assert jnp.allclose(out_big, ref_big, atol=1e-4, rtol=1e-4)

    print("KERNEL_OK")
</pallas_src>

<mosaic_0001>
module attributes {stable_mosaic.version = 11 : i64} {
  func.func @_mlp_kernel(%arg0: i32, %arg1: memref<16x128xf32, #tpu.memory_space<vmem>>, %arg2: memref<32x16xf32, #tpu.memory_space<vmem>>, %arg3: memref<32x1xf32, #tpu.memory_space<vmem>>, %arg4: memref<32x32xf32, #tpu.memory_space<vmem>>, %arg5: memref<32x1xf32, #tpu.memory_space<vmem>>, %arg6: memref<32x32xf32, #tpu.memory_space<vmem>>, %arg7: memref<32x1xf32, #tpu.memory_space<vmem>>, %arg8: memref<32x32xf32, #tpu.memory_space<vmem>>, %arg9: memref<32x1xf32, #tpu.memory_space<vmem>>, %arg10: memref<4x32xf32, #tpu.memory_space<vmem>>, %arg11: memref<4x1xf32, #tpu.memory_space<vmem>>, %arg12: memref<4x128xf32, #tpu.memory_space<vmem>>) attributes {dimension_semantics = [#tpu.dimension_semantics<parallel>], iteration_bounds = array<i64: 1>, scalar_prefetch = 0 : i64, scratch_operands = 0 : i64, tpu.core_type = #tpu.core_type<tc>, window_params = [{transform_indices = @transform_0, window_bounds = array<i64: 16, 128>}, {pipeline_mode = #tpu.pipeline_mode<synchronous>, transform_indices = @transform_1, window_bounds = array<i64: 32, 16>}, {pipeline_mode = #tpu.pipeline_mode<synchronous>, transform_indices = @transform_2, window_bounds = array<i64: 32, 1>}, {pipeline_mode = #tpu.pipeline_mode<synchronous>, transform_indices = @transform_3, window_bounds = array<i64: 32, 32>}, {pipeline_mode = #tpu.pipeline_mode<synchronous>, transform_indices = @transform_4, window_bounds = array<i64: 32, 1>}, {pipeline_mode = #tpu.pipeline_mode<synchronous>, transform_indices = @transform_5, window_bounds = array<i64: 32, 32>}, {pipeline_mode = #tpu.pipeline_mode<synchronous>, transform_indices = @transform_6, window_bounds = array<i64: 32, 1>}, {pipeline_mode = #tpu.pipeline_mode<synchronous>, transform_indices = @transform_7, window_bounds = array<i64: 32, 32>}, {pipeline_mode = #tpu.pipeline_mode<synchronous>, transform_indices = @transform_8, window_bounds = array<i64: 32, 1>}, {pipeline_mode = #tpu.pipeline_mode<synchronous>, transform_indices = @transform_9, window_bounds = array<i64: 4, 32>}, {pipeline_mode = #tpu.pipeline_mode<synchronous>, transform_indices = @transform_10, window_bounds = array<i64: 4, 1>}, {transform_indices = @transform_11, window_bounds = array<i64: 4, 128>}]} {
    %c0 = arith.constant 0 : index
    %c0_0 = arith.constant 0 : index
    %0 = vector.load %arg1[%c0, %c0_0] : memref<16x128xf32, #tpu.memory_space<vmem>>, vector<16x128xf32>
    %c0_1 = arith.constant 0 : index
    %c0_2 = arith.constant 0 : index
    %1 = vector.load %arg2[%c0_1, %c0_2] : memref<32x16xf32, #tpu.memory_space<vmem>>, vector<32x16xf32>
    %cst = arith.constant dense<0.000000e+00> : vector<32x128xf32>
    %2 = tpu.matmul %1, %0, %cst {dimension_numbers = #tpu.dot_dimension_numbers<[1], [0], [0], [1], [0, 0, 1, 1], [], []>} : vector<32x16xf32>, vector<16x128xf32>, vector<32x128xf32> -> vector<32x128xf32>
    %c0_3 = arith.constant 0 : index
    %c0_4 = arith.constant 0 : index
    %3 = vector.load %arg3[%c0_3, %c0_4] : memref<32x1xf32, #tpu.memory_space<vmem>>, vector<32x1xf32>
    %4 = vector.broadcast %3 : vector<32x1xf32> to vector<32x128xf32>
    %5 = arith.addf %2, %4 : vector<32x128xf32>
    %cst_5 = arith.constant 0.000000e+00 : f32
    %6 = vector.broadcast %cst_5 : f32 to vector<32x128xf32>
    %7 = arith.maximumf %5, %6 : vector<32x128xf32>
    %c0_6 = arith.constant 0 : index
    %c0_7 = arith.constant 0 : index
    %8 = vector.load %arg4[%c0_6, %c0_7] : memref<32x32xf32, #tpu.memory_space<vmem>>, vector<32x32xf32>
    %cst_8 = arith.constant dense<0.000000e+00> : vector<32x128xf32>
    %9 = tpu.matmul %8, %7, %cst_8 {dimension_numbers = #tpu.dot_dimension_numbers<[1], [0], [0], [1], [0, 0, 1, 1], [], []>} : vector<32x32xf32>, vector<32x128xf32>, vector<32x128xf32> -> vector<32x128xf32>
    %c0_9 = arith.constant 0 : index
    %c0_10 = arith.constant 0 : index
    %10 = vector.load %arg5[%c0_9, %c0_10] : memref<32x1xf32, #tpu.memory_space<vmem>>, vector<32x1xf32>
    %11 = vector.broadcast %10 : vector<32x1xf32> to vector<32x128xf32>
    %12 = arith.addf %9, %11 : vector<32x128xf32>
    %cst_11 = arith.constant 0.000000e+00 : f32
    %13 = vector.broadcast %cst_11 : f32 to vector<32x128xf32>
    %14 = arith.maximumf %12, %13 : vector<32x128xf32>
    %c0_12 = arith.constant 0 : index
    %c0_13 = arith.constant 0 : index
    %15 = vector.load %arg6[%c0_12, %c0_13] : memref<32x32xf32, #tpu.memory_space<vmem>>, vector<32x32xf32>
    %cst_14 = arith.constant dense<0.000000e+00> : vector<32x128xf32>
    %16 = tpu.matmul %15, %14, %cst_14 {dimension_numbers = #tpu.dot_dimension_numbers<[1], [0], [0], [1], [0, 0, 1, 1], [], []>} : vector<32x32xf32>, vector<32x128xf32>, vector<32x128xf32> -> vector<32x128xf32>
    %c0_15 = arith.constant 0 : index
    %c0_16 = arith.constant 0 : index
    %17 = vector.load %arg7[%c0_15, %c0_16] : memref<32x1xf32, #tpu.memory_space<vmem>>, vector<32x1xf32>
    %18 = vector.broadcast %17 : vector<32x1xf32> to vector<32x128xf32>
    %19 = arith.addf %16, %18 : vector<32x128xf32>
    %cst_17 = arith.constant 0.000000e+00 : f32
    %20 = vector.broadcast %cst_17 : f32 to vector<32x128xf32>
    %21 = arith.maximumf %19, %20 : vector<32x128xf32>
    %c0_18 = arith.constant 0 : index
    %c0_19 = arith.constant 0 : index
    %22 = vector.load %arg8[%c0_18, %c0_19] : memref<32x32xf32, #tpu.memory_space<vmem>>, vector<32x32xf32>
    %cst_20 = arith.constant dense<0.000000e+00> : vector<32x128xf32>
    %23 = tpu.matmul %22, %21, %cst_20 {dimension_numbers = #tpu.dot_dimension_numbers<[1], [0], [0], [1], [0, 0, 1, 1], [], []>} : vector<32x32xf32>, vector<32x128xf32>, vector<32x128xf32> -> vector<32x128xf32>
    %c0_21 = arith.constant 0 : index
    %c0_22 = arith.constant 0 : index
    %24 = vector.load %arg9[%c0_21, %c0_22] : memref<32x1xf32, #tpu.memory_space<vmem>>, vector<32x1xf32>
    %25 = vector.broadcast %24 : vector<32x1xf32> to vector<32x128xf32>
    %26 = arith.addf %23, %25 : vector<32x128xf32>
    %cst_23 = arith.constant 0.000000e+00 : f32
    %27 = vector.broadcast %cst_23 : f32 to vector<32x128xf32>
    %28 = arith.maximumf %26, %27 : vector<32x128xf32>
    %c0_24 = arith.constant 0 : index
    %c0_25 = arith.constant 0 : index
    %29 = vector.load %arg10[%c0_24, %c0_25] : memref<4x32xf32, #tpu.memory_space<vmem>>, vector<4x32xf32>
    %cst_26 = arith.constant dense<0.000000e+00> : vector<4x128xf32>
    %30 = tpu.matmul %29, %28, %cst_26 {dimension_numbers = #tpu.dot_dimension_numbers<[1], [0], [0], [1], [0, 0, 1, 1], [], []>} : vector<4x32xf32>, vector<32x128xf32>, vector<4x128xf32> -> vector<4x128xf32>
    %c0_27 = arith.constant 0 : index
    %c0_28 = arith.constant 0 : index
    %31 = vector.load %arg11[%c0_27, %c0_28] : memref<4x1xf32, #tpu.memory_space<vmem>>, vector<4x1xf32>
    %32 = vector.broadcast %31 : vector<4x1xf32> to vector<4x128xf32>
    %33 = arith.addf %30, %32 : vector<4x128xf32>
    %c0_29 = arith.constant 0 : index
    %c0_30 = arith.constant 0 : index
    %34 = vector.load %arg12[%c0_29, %c0_30] : memref<4x128xf32, #tpu.memory_space<vmem>>, vector<4x128xf32>
    tpu.vector_store %arg12[%c0_29, %c0_30], %33 {strides = array<i32>} : memref<4x128xf32, #tpu.memory_space<vmem>>, vector<4x128xf32>,
    return
  }
  func.func @transform_0(%arg0: i32) -> (i32, i32) {
    %c0_i32 = arith.constant 0 : i32
    %c0_i32_0 = arith.constant 0 : i32
    return %c0_i32, %arg0 : i32, i32
  }
  func.func @transform_1(%arg0: i32) -> (i32, i32) {
    %c0_i32 = arith.constant 0 : i32
    %c0_i32_0 = arith.constant 0 : i32
    %c0_i32_1 = arith.constant 0 : i32
    return %c0_i32, %c0_i32_0 : i32, i32
  }
  func.func @transform_2(%arg0: i32) -> (i32, i32) {
    %c0_i32 = arith.constant 0 : i32
    %c0_i32_0 = arith.constant 0 : i32
    %c0_i32_1 = arith.constant 0 : i32
    return %c0_i32, %c0_i32_0 : i32, i32
  }
  func.func @transform_3(%arg0: i32) -> (i32, i32) {
    %c0_i32 = arith.constant 0 : i32
    %c0_i32_0 = arith.constant 0 : i32
    %c0_i32_1 = arith.constant 0 : i32
    return %c0_i32, %c0_i32_0 : i32, i32
  }
  func.func @transform_4(%arg0: i32) -> (i32, i32) {
    %c0_i32 = arith.constant 0 : i32
    %c0_i32_0 = arith.constant 0 : i32
    %c0_i32_1 = arith.constant 0 : i32
    return %c0_i32, %c0_i32_0 : i32, i32
  }
  func.func @transform_5(%arg0: i32) -> (i32, i32) {
    %c0_i32 = arith.constant 0 : i32
    %c0_i32_0 = arith.constant 0 : i32
    %c0_i32_1 = arith.constant 0 : i32
    return %c0_i32, %c0_i32_0 : i32, i32
  }
  func.func @transform_6(%arg0: i32) -> (i32, i32) {
    %c0_i32 = arith.constant 0 : i32
    %c0_i32_0 = arith.constant 0 : i32
    %c0_i32_1 = arith.constant 0 : i32
    return %c0_i32, %c0_i32_0 : i32, i32
  }
  func.func @transform_7(%arg0: i32) -> (i32, i32) {
    %c0_i32 = arith.constant 0 : i32
    %c0_i32_0 = arith.constant 0 : i32
    %c0_i32_1 = arith.constant 0 : i32
    return %c0_i32, %c0_i32_0 : i32, i32
  }
  func.func @transform_8(%arg0: i32) -> (i32, i32) {
    %c0_i32 = arith.constant 0 : i32
    %c0_i32_0 = arith.constant 0 : i32
    %c0_i32_1 = arith.constant 0 : i32
    return %c0_i32, %c0_i32_0 : i32, i32
  }
  func.func @transform_9(%arg0: i32) -> (i32, i32) {
    %c0_i32 = arith.constant 0 : i32
    %c0_i32_0 = arith.constant 0 : i32
    %c0_i32_1 = arith.constant 0 : i32
    return %c0_i32, %c0_i32_0 : i32, i32
  }
  func.func @transform_10(%arg0: i32) -> (i32, i32) {
    %c0_i32 = arith.constant 0 : i32
    %c0_i32_0 = arith.constant 0 : i32
    %c0_i32_1 = arith.constant 0 : i32
    return %c0_i32, %c0_i32_0 : i32, i32
  }
  func.func @transform_11(%arg0: i32) -> (i32, i32) {
    %c0_i32 = arith.constant 0 : i32
    %c0_i32_0 = arith.constant 0 : i32
    return %c0_i32, %arg0 : i32, i32
  }
}

</mosaic_0001>

<llo_original>
// kernel: regression_nn_forward.1
$region0: #{regression_nn_forward.1}
  #allocation0 [shape = 'u32[]', space=smem, size = 0x4, offset = 0x4, fixed_abs, tag = 'smem constant byte address 0x4 - core index']
  #allocation1 [shape = 'u32[144,128]{1,0:T(1,128)}', space=vmem, size = 0x12000, scoped, tag = 'internal scratch']
  %s0 = inlined_call_operand.vmem [shape: f32[16,128], index: 0, kind: input, shape index: {}]
  %s1 = inlined_call_operand.vmem [shape: f32[32,16], index: 1, kind: input, shape index: {}]
  %s2 = inlined_call_operand.vmem [shape: f32[32,1], index: 2, kind: input, shape index: {}]
  %s3 = inlined_call_operand.vmem [shape: f32[32,32], index: 3, kind: input, shape index: {}]
  %s4 = inlined_call_operand.vmem [shape: f32[32,1], index: 4, kind: input, shape index: {}]
  %s5 = inlined_call_operand.vmem [shape: f32[32,32], index: 5, kind: input, shape index: {}]
  %s6 = inlined_call_operand.vmem [shape: f32[32,1], index: 6, kind: input, shape index: {}]
  %s7 = inlined_call_operand.vmem [shape: f32[32,32], index: 7, kind: input, shape index: {}]
  %s8 = inlined_call_operand.vmem [shape: f32[32,1], index: 8, kind: input, shape index: {}]
  %s9 = inlined_call_operand.vmem [shape: f32[4,32], index: 9, kind: input, shape index: {}]
  %s10 = inlined_call_operand.vmem [shape: f32[4,1], index: 10, kind: input, shape index: {}]
  %s11 = inlined_call_operand.vmem [shape: f32[4,128], index: 11, kind: output, shape index: {}]
  %s12 = sld [smem:[#allocation0]]
  $region54: #{regression_nn_forward.1} parent=0
    _
  %s14 = ssub.s32 1, %s12
  %s15 = scalar_select 0, %s14, %s12
  // Predicated region
  $region2: #{regression_nn_forward.1} parent=0 // pred_check
    _
  $region3: #{regression_nn_forward.1} parent=0 // pred_check_branch
    %17 = sbr.rel (0) target = $region5
  $region4: #{regression_nn_forward.1} parent=0 // pred_region
    _
  $region5: #{regression_nn_forward.1} parent=0 // pred_fallthru
    _
  // Predicated region
  $region6: #{regression_nn_forward.1} parent=0 // pred_check
    _
  $region7: #{regression_nn_forward.1} parent=0 // pred_check_branch
    %19 = sbr.rel (0) target = $region9
  $region8: #{regression_nn_forward.1} parent=0 // pred_region
    _
  $region9: #{regression_nn_forward.1} parent=0 // pred_fallthru
    _
  // Predicated region
  $region10: #{regression_nn_forward.1} parent=0 // pred_check
    _
  $region11: #{regression_nn_forward.1} parent=0 // pred_check_branch
    %21 = sbr.rel (0) target = $region13
  $region12: #{regression_nn_forward.1} parent=0 // pred_region
    _
  $region13: #{regression_nn_forward.1} parent=0 // pred_fallthru
    _
  // Predicated region
  $region14: #{regression_nn_forward.1} parent=0 // pred_check
    _
  $region15: #{regression_nn_forward.1} parent=0 // pred_check_branch
    %23 = sbr.rel (0) target = $region17
  $region16: #{regression_nn_forward.1} parent=0 // pred_region
    _
  $region17: #{regression_nn_forward.1} parent=0 // pred_fallthru
    _
  // Predicated region
  $region18: #{regression_nn_forward.1} parent=0 // pred_check
    _
  $region19: #{regression_nn_forward.1} parent=0 // pred_check_branch
    %25 = sbr.rel (0) target = $region21
  $region20: #{regression_nn_forward.1} parent=0 // pred_region
    _
  $region21: #{regression_nn_forward.1} parent=0 // pred_fallthru
    _
  // Predicated region
  $region22: #{regression_nn_forward.1} parent=0 // pred_check
    _
  $region23: #{regression_nn_forward.1} parent=0 // pred_check_branch
    %27 = sbr.rel (0) target = $region25
  $region24: #{regression_nn_forward.1} parent=0 // pred_region
    _
  $region25: #{regression_nn_forward.1} parent=0 // pred_fallthru
    _
  // Predicated region
  $region26: #{regression_nn_forward.1} parent=0 // pred_check
    _
  $region27: #{regression_nn_forward.1} parent=0 // pred_check_branch
    %29 = sbr.rel (0) target = $region29
  $region28: #{regression_nn_forward.1} parent=0 // pred_region
    _
  $region29: #{regression_nn_forward.1} parent=0 // pred_fallthru
    _
  // Predicated region
  $region30: #{regression_nn_forward.1} parent=0 // pred_check
    _
  $region31: #{regression_nn_forward.1} parent=0 // pred_check_branch
    %31 = sbr.rel (0) target = $region33
  $region32: #{regression_nn_forward.1} parent=0 // pred_region
    _
  $region33: #{regression_nn_forward.1} parent=0 // pred_fallthru
    _
  // Predicated region
  $region34: #{regression_nn_forward.1} parent=0 // pred_check
    _
  $region35: #{regression_nn_forward.1} parent=0 // pred_check_branch
    %33 = sbr.rel (0) target = $region37
  $region36: #{regression_nn_forward.1} parent=0 // pred_region
    _
  $region37: #{regression_nn_forward.1} parent=0 // pred_fallthru
    _
  // Predicated region
  $region38: #{regression_nn_forward.1} parent=0 // pred_check
    _
  $region39: #{regression_nn_forward.1} parent=0 // pred_check_branch
    %35 = sbr.rel (0) target = $region41
  $region40: #{regression_nn_forward.1} parent=0 // pred_region
    _
  $region41: #{regression_nn_forward.1} parent=0 // pred_fallthru
    _
  // Predicated region
  $region42: #{regression_nn_forward.1} parent=0 // pred_check
    _
  $region43: #{regression_nn_forward.1} parent=0 // pred_check_branch
    %37 = sbr.rel (0) target = $region45
  $region44: #{regression_nn_forward.1} parent=0 // pred_region
    _
  $region45: #{regression_nn_forward.1} parent=0 // pred_fallthru
    _
  %v38 = vld [vmem:[%s0] sm:$0xff]
  %v39 = vld [vmem:[%s0 + $0x8] sm:$0xff]
  %v40 = vld [vmem:[%s1] sm:$0xff]
  %v41 = vld [vmem:[%s1 + $0x8] sm:$0xff]
  %v42 = vld [vmem:[%s1 + $0x10] sm:$0xff]
  %v43 = vld [vmem:[%s1 + $0x18] sm:$0xff]
  %v44 = vld [vmem:[%s2] sm:$0xff]
  %v45 = vld [vmem:[%s2 + $0x8] sm:$0xff]
  %v46 = vld [vmem:[%s2 + $0x10] sm:$0xff]
  %v47 = vld [vmem:[%s2 + $0x18] sm:$0xff]
  %49 = vset.pattern.permute.xlu0 0
  %50 = vperm.xlu0 %49, %v44
  %v51 = vpop.permute.xlu0 %50
  %54 = vset.pattern.permute.xlu0 0
  %55 = vperm.xlu0 %54, %v45
  %v56 = vpop.permute.xlu0 %55
  %59 = vset.pattern.permute.xlu0 0
  %60 = vperm.xlu0 %59, %v46
  %v61 = vpop.permute.xlu0 %60
  %64 = vset.pattern.permute.xlu0 0
  %65 = vperm.xlu0 %64, %v47
  %v66 = vpop.permute.xlu0 %65
  %vm68 = vcmask 130048
  %v70 = vsel %vm68, %v40, 0
  %v73 = vsel %vm68, %v41, 0
  %v76 = vsel %vm68, %v42, 0
  %v79 = vsel %vm68, %v43, 0
  %81 = vmatprep.subr.mxu0 0.0
  %82 = vmatpush1.msra.mxu0 %v38
  %83 = vmatprep.subr.mxu0 0.0
  %84 = vmatpush1.msra.mxu0 %v39
  %85 = vmatprep.subr.mxu0 0.0
  %86 = vmatpush1.msra.mxu0 0.0
  %87 = vmatprep.subr.mxu0 0.0
  %88 = vmatpush1.msra.mxu0 0.0
  %89 = vmatprep.subr.mxu0 0.0
  %90 = vmatpush1.msra.mxu0 0.0
  %91 = vmatprep.subr.mxu0 0.0
  %92 = vmatpush1.msra.mxu0 0.0
  %93 = vmatprep.subr.mxu0 0.0
  %94 = vmatpush1.msra.mxu0 0.0
  %95 = vmatprep.subr.mxu0 0.0
  %96 = vmatpush1.msra.mxu0 0.0
  %97 = vmatprep.subr.mxu0 0.0
  %98 = vmatpush1.msra.mxu0 0.0
  %99 = vmatprep.subr.mxu0 0.0
  %100 = vmatpush1.msra.mxu0 0.0
  %101 = vmatprep.subr.mxu0 0.0
  %102 = vmatpush1.msra.mxu0 0.0
  %103 = vmatprep.subr.mxu0 0.0
  %104 = vmatpush1.msra.mxu0 0.0
  %105 = vmatprep.subr.mxu0 0.0
  %106 = vmatpush1.msra.mxu0 0.0
  %107 = vmatprep.subr.mxu0 0.0
  %108 = vmatpush1.msra.mxu0 0.0
  %109 = vmatprep.subr.mxu0 0.0
  %110 = vmatpush1.msra.mxu0 0.0
  %111 = vmatprep.subr.mxu0 0.0
  %112 = vmatpush1.msra.mxu0 0.0
  %113 = vmatprep.subr.mxu0 0.0
  %114 = vmatpush1.msra.mxu0 0.0
  %115 = vmatprep.subr.mxu0 0.0
  %116 = vmatpush1.msra.mxu0 0.0
  %117 = vmatprep.subr.mxu0 0.0
  %118 = vmatpush1.msra.mxu0 0.0
  %119 = vmatprep.subr.mxu0 0.0
  %120 = vmatpush1.msra.mxu0 0.0
  %121 = vmatprep.subr.mxu0 0.0
  %122 = vmatpush1.msra.mxu0 0.0
  %123 = vmatprep.subr.mxu0 0.0
  %124 = vmatpush1.msra.mxu0 0.0
  %125 = vmatprep.subr.mxu0 0.0
  %126 = vmatpush1.msra.mxu0 0.0
  %127 = vmatprep.subr.mxu0 0.0
  %128 = vmatpush1.msra.mxu0 0.0
  %129 = vmatprep.subr.mxu0 0.0
  %130 = vmatpush1.msra.mxu0 0.0
  %131 = vmatprep.subr.mxu0 0.0
  %132 = vmatpush1.msra.mxu0 0.0
  %133 = vmatprep.subr.mxu0 0.0
  %134 = vmatpush1.msra.mxu0 0.0
  %135 = vmatprep.subr.mxu0 0.0
  %136 = vmatpush1.msra.mxu0 0.0
  %137 = vmatprep.subr.mxu0 0.0
  %138 = vmatpush1.msra.mxu0 0.0
  %139 = vmatprep.subr.mxu0 0.0
  %140 = vmatpush1.msra.mxu0 0.0
  %141 = vmatprep.subr.mxu0 0.0
  %142 = vmatpush1.msra.mxu0 0.0
  %143 = vmatprep.subr.mxu0 0.0
  %144 = vmatpush1.msra.mxu0 0.0
  %145 = vmatprep.mubr.f32.mxu0 0.0
  %146 = vmatmul.mubr.f32.gmra.mrb[0].mxu0 %v70
  %v147 = vpop.f32.mrb[0].mxu0
  %v148 = vadd.f32 %v51, %v147
  %v149 = vpop.f32.mrb[0].mxu0
  %150 = vmatprep.mubr.f32.mxu0 0.0
  %151 = vmatmul.mubr.f32.gmra.mrb[0].mxu0 %v73
  %v152 = vpop.f32.mrb[0].mxu0
  %v153 = vadd.f32 %v56, %v152
  %v154 = vpop.f32.mrb[0].mxu0
  %155 = vmatprep.mubr.f32.mxu0 0.0
  %156 = vmatmul.mubr.f32.gmra.mrb[0].mxu0 %v76
  %v157 = vpop.f32.mrb[0].mxu0
  %v158 = vadd.f32 %v61, %v157
  %v159 = vpop.f32.mrb[0].mxu0
  %160 = vmatprep.mubr.f32.mxu0 0.0
  %161 = vmatmul.mubr.f32.gmra.mrb[0].mxu0 %v79
  %v162 = vpop.f32.mrb[0].mxu0
  %v163 = vadd.f32 %v66, %v162
  %v164 = vpop.f32.mrb[0].mxu0
  %165 = vdwg.mxu0
  %v166 = vmax.f32 %v148, 0.0
  %v167 = vmax.f32 %v153, 0.0
  %v168 = vmax.f32 %v158, 0.0
  %v169 = vmax.f32 %v163, 0.0
  %v170 = vld [vmem:[%s3] sm:$0xff]
  %v171 = vld [vmem:[%s3 + $0x8] sm:$0xff]
  %v172 = vld [vmem:[%s3 + $0x10] sm:$0xff]
  %v173 = vld [vmem:[%s3 + $0x18] sm:$0xff]
  %v174 = vld [vmem:[%s4] sm:$0xff]
  %v175 = vld [vmem:[%s4 + $0x8] sm:$0xff]
  %v176 = vld [vmem:[%s4 + $0x10] sm:$0xff]
  %v177 = vld [vmem:[%s4 + $0x18] sm:$0xff]
  %179 = vset.pattern.permute.xlu0 0
  %180 = vperm.xlu0 %179, %v174
  %v181 = vpop.permute.xlu0 %180
  %184 = vset.pattern.permute.xlu0 0
  %185 = vperm.xlu0 %184, %v175
  %v186 = vpop.permute.xlu0 %185
  %189 = vset.pattern.permute.xlu0 0
  %190 = vperm.xlu0 %189, %v176
  %v191 = vpop.permute.xlu0 %190
  %194 = vset.pattern.permute.xlu0 0
  %195 = vperm.xlu0 %194, %v177
  %v196 = vpop.permute.xlu0 %195
  %vm198 = vcmask 261120
  %v200 = vsel %vm198, %v170, 0
  %v203 = vsel %vm198, %v171, 0
  %v206 = vsel %vm198, %v172, 0
  %v209 = vsel %vm198, %v173, 0
  %211 = vmatprep.subr.mxu0 0.0
  %212 = vmatpush1.msra.mxu0 %v166
  %213 = vmatprep.subr.mxu0 0.0
  %214 = vmatpush1.msra.mxu0 %v167
  %215 = vmatprep.subr.mxu0 0.0
  %216 = vmatpush1.msra.mxu0 %v168
  %217 = vmatprep.subr.mxu0 0.0
  %218 = vmatpush1.msra.mxu0 %v169
  %219 = vmatprep.subr.mxu0 0.0
  %220 = vmatpush1.msra.mxu0 0.0
  %221 = vmatprep.subr.mxu0 0.0
  %222 = vmatpush1.msra.mxu0 0.0
  %223 = vmatprep.subr.mxu0 0.0
  %224 = vmatpush1.msra.mxu0 0.0
  %225 = vmatprep.subr.mxu0 0.0
  %226 = vmatpush1.msra.mxu0 0.0
  %227 = vmatprep.subr.mxu0 0.0
  %228 = vmatpush1.msra.mxu0 0.0
  %229 = vmatprep.subr.mxu0 0.0
  %230 = vmatpush1.msra.mxu0 0.0
  %231 = vmatprep.subr.mxu0 0.0
  %232 = vmatpush1.msra.mxu0 0.0
  %233 = vmatprep.subr.mxu0 0.0
  %234 = vmatpush1.msra.mxu0 0.0
  %235 = vmatprep.subr.mxu0 0.0
  %236 = vmatpush1.msra.mxu0 0.0
  %237 = vmatprep.subr.mxu0 0.0
  %238 = vmatpush1.msra.mxu0 0.0
  %239 = vmatprep.subr.mxu0 0.0
  %240 = vmatpush1.msra.mxu0 0.0
  %241 = vmatprep.subr.mxu0 0.0
  %242 = vmatpush1.msra.mxu0 0.0
  %243 = vmatprep.subr.mxu0 0.0
  %244 = vmatpush1.msra.mxu0 0.0
  %245 = vmatprep.subr.mxu0 0.0
  %246 = vmatpush1.msra.mxu0 0.0
  %247 = vmatprep.subr.mxu0 0.0
  %248 = vmatpush1.msra.mxu0 0.0
  %249 = vmatprep.subr.mxu0 0.0
  %250 = vmatpush1.msra.mxu0 0.0
  %251 = vmatprep.subr.mxu0 0.0
  %252 = vmatpush1.msra.mxu0 0.0
  %253 = vmatprep.subr.mxu0 0.0
  %254 = vmatpush1.msra.mxu0 0.0
  %255 = vmatprep.subr.mxu0 0.0
  %256 = vmatpush1.msra.mxu0 0.0
  %257 = vmatprep.subr.mxu0 0.0
  %258 = vmatpush1.msra.mxu0 0.0
  %259 = vmatprep.subr.mxu0 0.0
  %260 = vmatpush1.msra.mxu0 0.0
  %261 = vmatprep.subr.mxu0 0.0
  %262 = vmatpush1.msra.mxu0 0.0
  %263 = vmatprep.subr.mxu0 0.0
  %264 = vmatpush1.msra.mxu0 0.0
  %265 = vmatprep.subr.mxu0 0.0
  %266 = vmatpush1.msra.mxu0 0.0
  %267 = vmatprep.subr.mxu0 0.0
  %268 = vmatpush1.msra.mxu0 0.0
  %269 = vmatprep.subr.mxu0 0.0
  %270 = vmatpush1.msra.mxu0 0.0
  %271 = vmatprep.subr.mxu0 0.0
  %272 = vmatpush1.msra.mxu0 0.0
  %273 = vmatprep.subr.mxu0 0.0
  %274 = vmatpush1.msra.mxu0 0.0
  %275 = vmatprep.mubr.f32.mxu0 0.0
  %276 = vmatmul.mubr.f32.gmra.mrb[0].mxu0 %v200
  %v277 = vpop.f32.mrb[0].mxu0
  %v278 = vadd.f32 %v181, %v277
  %v279 = vpop.f32.mrb[0].mxu0
  %280 = vmatprep.mubr.f32.mxu0 0.0
  %281 = vmatmul.mubr.f32.gmra.mrb[0].mxu0 %v203
  %v282 = vpop.f32.mrb[0].mxu0
  %v283 = vadd.f32 %v186, %v282
  %v284 = vpop.f32.mrb[0].mxu0
  %285 = vmatprep.mubr.f32.mxu0 0.0
  %286 = vmatmul.mubr.f32.gmra.mrb[0].mxu0 %v206
  %v287 = vpop.f32.mrb[0].mxu0
  %v288 = vadd.f32 %v191, %v287
  %v289 = vpop.f32.mrb[0].mxu0
  %290 = vmatprep.mubr.f32.mxu0 0.0
  %291 = vmatmul.mubr.f32.gmra.mrb[0].mxu0 %v209
  %v292 = vpop.f32.mrb[0].mxu0
  %v293 = vadd.f32 %v196, %v292
  %v294 = vpop.f32.mrb[0].mxu0
  %295 = vdwg.mxu0
  %v296 = vmax.f32 %v278, 0.0
  %v297 = vmax.f32 %v283, 0.0
  %v298 = vmax.f32 %v288, 0.0
  %v299 = vmax.f32 %v293, 0.0
  %v300 = vld [vmem:[%s5] sm:$0xff]
  %v301 = vld [vmem:[%s5 + $0x8] sm:$0xff]
  %v302 = vld [vmem:[%s5 + $0x10] sm:$0xff]
  %v303 = vld [vmem:[%s5 + $0x18] sm:$0xff]
  %v304 = vld [vmem:[%s6] sm:$0xff]
  %v305 = vld [vmem:[%s6 + $0x8] sm:$0xff]
  %v306 = vld [vmem:[%s6 + $0x10] sm:$0xff]
  %v307 = vld [vmem:[%s6 + $0x18] sm:$0xff]
  %309 = vset.pattern.permute.xlu0 0
  %310 = vperm.xlu0 %309, %v304
  %v311 = vpop.permute.xlu0 %310
  %314 = vset.pattern.permute.xlu0 0
  %315 = vperm.xlu0 %314, %v305
  %v316 = vpop.permute.xlu0 %315
  %319 = vset.pattern.permute.xlu0 0
  %320 = vperm.xlu0 %319, %v306
  %v321 = vpop.permute.xlu0 %320
  %324 = vset.pattern.permute.xlu0 0
  %325 = vperm.xlu0 %324, %v307
  %v326 = vpop.permute.xlu0 %325
  %v329 = vsel %vm198, %v300, 0
  %v332 = vsel %vm198, %v301, 0
  %v335 = vsel %vm198, %v302, 0
  %v338 = vsel %vm198, %v303, 0
  %340 = vmatprep.subr.mxu0 0.0
  %341 = vmatpush1.msra.mxu0 %v296
  %342 = vmatprep.subr.mxu0 0.0
  %343 = vmatpush1.msra.mxu0 %v297
  %344 = vmatprep.subr.mxu0 0.0
  %345 = vmatpush1.msra.mxu0 %v298
  %346 = vmatprep.subr.mxu0 0.0
  %347 = vmatpush1.msra.mxu0 %v299
  %348 = vmatprep.subr.mxu0 0.0
  %349 = vmatpush1.msra.mxu0 0.0
  %350 = vmatprep.subr.mxu0 0.0
  %351 = vmatpush1.msra.mxu0 0.0
  %352 = vmatprep.subr.mxu0 0.0
  %353 = vmatpush1.msra.mxu0 0.0
  %354 = vmatprep.subr.mxu0 0.0
  %355 = vmatpush1.msra.mxu0 0.0
  %356 = vmatprep.subr.mxu0 0.0
  %357 = vmatpush1.msra.mxu0 0.0
  %358 = vmatprep.subr.mxu0 0.0
  %359 = vmatpush1.msra.mxu0 0.0
  %360 = vmatprep.subr.mxu0 0.0
  %361 = vmatpush1.msra.mxu0 0.0
  %362 = vmatprep.subr.mxu0 0.0
  %363 = vmatpush1.msra.mxu0 0.0
  %364 = vmatprep.subr.mxu0 0.0
  %365 = vmatpush1.msra.mxu0 0.0
  %366 = vmatprep.subr.mxu0 0.0
  %367 = vmatpush1.msra.mxu0 0.0
  %368 = vmatprep.subr.mxu0 0.0
  %369 = vmatpush1.msra.mxu0 0.0
  %370 = vmatprep.subr.mxu0 0.0
  %371 = vmatpush1.msra.mxu0 0.0
  %372 = vmatprep.subr.mxu0 0.0
  %373 = vmatpush1.msra.mxu0 0.0
  %374 = vmatprep.subr.mxu0 0.0
  %375 = vmatpush1.msra.mxu0 0.0
  %376 = vmatprep.subr.mxu0 0.0
  %377 = vmatpush1.msra.mxu0 0.0
  %378 = vmatprep.subr.mxu0 0.0
  %379 = vmatpush1.msra.mxu0 0.0
  %380 = vmatprep.subr.mxu0 0.0
  %381 = vmatpush1.msra.mxu0 0.0
  %382 = vmatprep.subr.mxu0 0.0
  %383 = vmatpush1.msra.mxu0 0.0
  %384 = vmatprep.subr.mxu0 0.0
  %385 = vmatpush1.msra.mxu0 0.0
  %386 = vmatprep.subr.mxu0 0.0
  %387 = vmatpush1.msra.mxu0 0.0
  %388 = vmatprep.subr.mxu0 0.0
  %389 = vmatpush1.msra.mxu0 0.0
  %390 = vmatprep.subr.mxu0 0.0
  %391 = vmatpush1.msra.mxu0 0.0
  %392 = vmatprep.subr.mxu0 0.0
  %393 = vmatpush1.msra.mxu0 0.0
  %394 = vmatprep.subr.mxu0 0.0
  %395 = vmatpush1.msra.mxu0 0.0
  %396 = vmatprep.subr.mxu0 0.0
  %397 = vmatpush1.msra.mxu0 0.0
  %398 = vmatprep.subr.mxu0 0.0
  %399 = vmatpush1.msra.mxu0 0.0
  %400 = vmatprep.subr.mxu0 0.0
  %401 = vmatpush1.msra.mxu0 0.0
  %402 = vmatprep.subr.mxu0 0.0
  %403 = vmatpush1.msra.mxu0 0.0
  %404 = vmatprep.mubr.f32.mxu0 0.0
  %405 = vmatmul.mubr.f32.gmra.mrb[0].mxu0 %v329
  %v406 = vpop.f32.mrb[0].mxu0
  %v407 = vadd.f32 %v311, %v406
  %v408 = vpop.f32.mrb[0].mxu0
  %409 = vmatprep.mubr.f32.mxu0 0.0
  %410 = vmatmul.mubr.f32.gmra.mrb[0].mxu0 %v332
  %v411 = vpop.f32.mrb[0].mxu0
  %v412 = vadd.f32 %v316, %v411
  %v413 = vpop.f32.mrb[0].mxu0
  %414 = vmatprep.mubr.f32.mxu0 0.0
  %415 = vmatmul.mubr.f32.gmra.mrb[0].mxu0 %v335
  %v416 = vpop.f32.mrb[0].mxu0
  %v417 = vadd.f32 %v321, %v416
  %v418 = vpop.f32.mrb[0].mxu0
  %419 = vmatprep.mubr.f32.mxu0 0.0
  %420 = vmatmul.mubr.f32.gmra.mrb[0].mxu0 %v338
  %v421 = vpop.f32.mrb[0].mxu0
  %v422 = vadd.f32 %v326, %v421
  %v423 = vpop.f32.mrb[0].mxu0
  %424 = vdwg.mxu0
  %v425 = vmax.f32 %v407, 0.0
  %v426 = vmax.f32 %v412, 0.0
  %v427 = vmax.f32 %v417, 0.0
  %v428 = vmax.f32 %v422, 0.0
  %v429 = vld [vmem:[%s7] sm:$0xff]
  %v430 = vld [vmem:[%s7 + $0x8] sm:$0xff]
  %v431 = vld [vmem:[%s7 + $0x10] sm:$0xff]
  %v432 = vld [vmem:[%s7 + $0x18] sm:$0xff]
  %v433 = vld [vmem:[%s8] sm:$0xff]
  %v434 = vld [vmem:[%s8 + $0x8] sm:$0xff]
  %v435 = vld [vmem:[%s8 + $0x10] sm:$0xff]
  %v436 = vld [vmem:[%s8 + $0x18] sm:$0xff]
  %438 = vset.pattern.permute.xlu0 0
  %439 = vperm.xlu0 %438, %v433
  %v440 = vpop.permute.xlu0 %439
  %443 = vset.pattern.permute.xlu0 0
  %444 = vperm.xlu0 %443, %v434
  %v445 = vpop.permute.xlu0 %444
  %448 = vset.pattern.permute.xlu0 0
  %449 = vperm.xlu0 %448, %v435
  %v450 = vpop.permute.xlu0 %449
  %453 = vset.pattern.permute.xlu0 0
  %454 = vperm.xlu0 %453, %v436
  %v455 = vpop.permute.xlu0 %454
  %v458 = vsel %vm198, %v429, 0
  %v461 = vsel %vm198, %v430, 0
  %v464 = vsel %vm198, %v431, 0
  %v467 = vsel %vm198, %v432, 0
  %469 = vmatprep.subr.mxu0 0.0
  %470 = vmatpush1.msra.mxu0 %v425
  %471 = vmatprep.subr.mxu0 0.0
  %472 = vmatpush1.msra.mxu0 %v426
  %473 = vmatprep.subr.mxu0 0.0
  %474 = vmatpush1.msra.mxu0 %v427
  %475 = vmatprep.subr.mxu0 0.0
  %476 = vmatpush1.msra.mxu0 %v428
  %477 = vmatprep.subr.mxu0 0.0
  %478 = vmatpush1.msra.mxu0 0.0
  %479 = vmatprep.subr.mxu0 0.0
  %480 = vmatpush1.msra.mxu0 0.0
  %481 = vmatprep.subr.mxu0 0.0
  %482 = vmatpush1.msra.mxu0 0.0
  %483 = vmatprep.subr.mxu0 0.0
  %484 = vmatpush1.msra.mxu0 0.0
  %485 = vmatprep.subr.mxu0 0.0
  %486 = vmatpush1.msra.mxu0 0.0
  %487 = vmatprep.subr.mxu0 0.0
  %488 = vmatpush1.msra.mxu0 0.0
  %489 = vmatprep.subr.mxu0 0.0
  %490 = vmatpush1.msra.mxu0 0.0
  %491 = vmatprep.subr.mxu0 0.0
  %492 = vmatpush1.msra.mxu0 0.0
  %493 = vmatprep.subr.mxu0 0.0
  %494 = vmatpush1.msra.mxu0 0.0
  %495 = vmatprep.subr.mxu0 0.0
  %496 = vmatpush1.msra.mxu0 0.0
  %497 = vmatprep.subr.mxu0 0.0
  %498 = vmatpush1.msra.mxu0 0.0
  %499 = vmatprep.subr.mxu0 0.0
  %500 = vmatpush1.msra.mxu0 0.0
  %501 = vmatprep.subr.mxu0 0.0
  %502 = vmatpush1.msra.mxu0 0.0
  %503 = vmatprep.subr.mxu0 0.0
  %504 = vmatpush1.msra.mxu0 0.0
  %505 = vmatprep.subr.mxu0 0.0
  %506 = vmatpush1.msra.mxu0 0.0
  %507 = vmatprep.subr.mxu0 0.0
  %508 = vmatpush1.msra.mxu0 0.0
  %509 = vmatprep.subr.mxu0 0.0
  %510 = vmatpush1.msra.mxu0 0.0
  %511 = vmatprep.subr.mxu0 0.0
  %512 = vmatpush1.msra.mxu0 0.0
  %513 = vmatprep.subr.mxu0 0.0
  %514 = vmatpush1.msra.mxu0 0.0
  %515 = vmatprep.subr.mxu0 0.0
  %516 = vmatpush1.msra.mxu0 0.0
  %517 = vmatprep.subr.mxu0 0.0
  %518 = vmatpush1.msra.mxu0 0.0
  %519 = vmatprep.subr.mxu0 0.0
  %520 = vmatpush1.msra.mxu0 0.0
  %521 = vmatprep.subr.mxu0 0.0
  %522 = vmatpush1.msra.mxu0 0.0
  %523 = vmatprep.subr.mxu0 0.0
  %524 = vmatpush1.msra.mxu0 0.0
  %525 = vmatprep.subr.mxu0 0.0
  %526 = vmatpush1.msra.mxu0 0.0
  %527 = vmatprep.subr.mxu0 0.0
  %528 = vmatpush1.msra.mxu0 0.0
  %529 = vmatprep.subr.mxu0 0.0
  %530 = vmatpush1.msra.mxu0 0.0
  %531 = vmatprep.subr.mxu0 0.0
  %532 = vmatpush1.msra.mxu0 0.0
  %533 = vmatprep.mubr.f32.mxu0 0.0
  %534 = vmatmul.mubr.f32.gmra.mrb[0].mxu0 %v458
  %v535 = vpop.f32.mrb[0].mxu0
  %v536 = vadd.f32 %v440, %v535
  %v537 = vpop.f32.mrb[0].mxu0
  %538 = vmatprep.mubr.f32.mxu0 0.0
  %539 = vmatmul.mubr.f32.gmra.mrb[0].mxu0 %v461
  %v540 = vpop.f32.mrb[0].mxu0
  %v541 = vadd.f32 %v445, %v540
  %v542 = vpop.f32.mrb[0].mxu0
  %543 = vmatprep.mubr.f32.mxu0 0.0
  %544 = vmatmul.mubr.f32.gmra.mrb[0].mxu0 %v464
  %v545 = vpop.f32.mrb[0].mxu0
  %v546 = vadd.f32 %v450, %v545
  %v547 = vpop.f32.mrb[0].mxu0
  %548 = vmatprep.mubr.f32.mxu0 0.0
  %549 = vmatmul.mubr.f32.gmra.mrb[0].mxu0 %v467
  %v550 = vpop.f32.mrb[0].mxu0
  %v551 = vadd.f32 %v455, %v550
  %v552 = vpop.f32.mrb[0].mxu0
  %553 = vdwg.mxu0
  %v554 = vmax.f32 %v536, 0.0
  %v555 = vmax.f32 %v541, 0.0
  %v556 = vmax.f32 %v546, 0.0
  %v557 = vmax.f32 %v551, 0.0
  %v558 = vld [vmem:[%s9] sm:$0xf]
  %v559 = vld [vmem:[%s10] sm:$0xf]
  %561 = vset.pattern.permute.xlu0 0
  %562 = vperm.xlu0 %561, %v559
  %v563 = vpop.permute.xlu0 %562
  %v566 = vsel %vm198, %v558, 0
  %568 = vmatprep.subr.mxu0 0.0
  %569 = vmatpush1.msra.mxu0 %v554
  %570 = vmatprep.subr.mxu0 0.0
  %571 = vmatpush1.msra.mxu0 %v555
  %572 = vmatprep.subr.mxu0 0.0
  %573 = vmatpush1.msra.mxu0 %v556
  %574 = vmatprep.subr.mxu0 0.0
  %575 = vmatpush1.msra.mxu0 %v557
  %576 = vmatprep.subr.mxu0 0.0
  %577 = vmatpush1.msra.mxu0 0.0
  %578 = vmatprep.subr.mxu0 0.0
  %579 = vmatpush1.msra.mxu0 0.0
  %580 = vmatprep.subr.mxu0 0.0
  %581 = vmatpush1.msra.mxu0 0.0
  %582 = vmatprep.subr.mxu0 0.0
  %583 = vmatpush1.msra.mxu0 0.0
  %584 = vmatprep.subr.mxu0 0.0
  %585 = vmatpush1.msra.mxu0 0.0
  %586 = vmatprep.subr.mxu0 0.0
  %587 = vmatpush1.msra.mxu0 0.0
  %588 = vmatprep.subr.mxu0 0.0
  %589 = vmatpush1.msra.mxu0 0.0
  %590 = vmatprep.subr.mxu0 0.0
  %591 = vmatpush1.msra.mxu0 0.0
  %592 = vmatprep.subr.mxu0 0.0
  %593 = vmatpush1.msra.mxu0 0.0
  %594 = vmatprep.subr.mxu0 0.0
  %595 = vmatpush1.msra.mxu0 0.0
  %596 = vmatprep.subr.mxu0 0.0
  %597 = vmatpush1.msra.mxu0 0.0
  %598 = vmatprep.subr.mxu0 0.0
  %599 = vmatpush1.msra.mxu0 0.0
  %600 = vmatprep.subr.mxu0 0.0
  %601 = vmatpush1.msra.mxu0 0.0
  %602 = vmatprep.subr.mxu0 0.0
  %603 = vmatpush1.msra.mxu0 0.0
  %604 = vmatprep.subr.mxu0 0.0
  %605 = vmatpush1.msra.mxu0 0.0
  %606 = vmatprep.subr.mxu0 0.0
  %607 = vmatpush1.msra.mxu0 0.0
  %608 = vmatprep.subr.mxu0 0.0
  %609 = vmatpush1.msra.mxu0 0.0
  %610 = vmatprep.subr.mxu0 0.0
  %611 = vmatpush1.msra.mxu0 0.0
  %612 = vmatprep.subr.mxu0 0.0
  %613 = vmatpush1.msra.mxu0 0.0
  %614 = vmatprep.subr.mxu0 0.0
  %615 = vmatpush1.msra.mxu0 0.0
  %616 = vmatprep.subr.mxu0 0.0
  %617 = vmatpush1.msra.mxu0 0.0
  %618 = vmatprep.subr.mxu0 0.0
  %619 = vmatpush1.msra.mxu0 0.0
  %620 = vmatprep.subr.mxu0 0.0
  %621 = vmatpush1.msra.mxu0 0.0
  %622 = vmatprep.subr.mxu0 0.0
  %623 = vmatpush1.msra.mxu0 0.0
  %624 = vmatprep.subr.mxu0 0.0
  %625 = vmatpush1.msra.mxu0 0.0
  %626 = vmatprep.subr.mxu0 0.0
  %627 = vmatpush1.msra.mxu0 0.0
  %628 = vmatprep.subr.mxu0 0.0
  %629 = vmatpush1.msra.mxu0 0.0
  %630 = vmatprep.subr.mxu0 0.0
  %631 = vmatpush1.msra.mxu0 0.0
  %632 = vmatprep.mubr.f32.mxu0 0.0
  %633 = vmatmul.mubr.f32.gmra.mrb[0].mxu0 %v566
  %v634 = vpop.f32.mrb[0].mxu0
  %v635 = vadd.f32 %v563, %v634
  %v636 = vpop.f32.mrb[0].mxu0
  %637 = vdwg.mxu0
  %638 = vst [vmem:[%s11] sm:$0xf] %v635
  // Predicated region
  $region46: #{regression_nn_forward.1} parent=0 // pred_check
    _
  $region47: #{regression_nn_forward.1} parent=0 // pred_check_branch
    %640 = sbr.rel (0) target = $region49
  $region48: #{regression_nn_forward.1} parent=0 // pred_region
    _
  $region49: #{regression_nn_forward.1} parent=0 // pred_fallthru
    _
  // Predicated region
  $region50: #{regression_nn_forward.1} parent=0 // pred_check
    _
  $region51: #{regression_nn_forward.1} parent=0 // pred_check_branch
    %642 = sbr.rel (0) target = $region53
  $region52: #{regression_nn_forward.1} parent=0 // pred_region
    _
  $region53: #{regression_nn_forward.1} parent=0 // pred_fallthru
    _

</llo_original>
